<compile_context>
chip_gen: v7x
topology: tpu7x:2x2x1
jax: 0.10.0
libtpu: 0.0.40
codegen_flags: <defaults>
</compile_context>

<pallas_src>
import functools
import math
from typing import NamedTuple

import jax
import jax.numpy as jnp
from jax import lax
from jax.experimental import pallas as pl
from jax.experimental.pallas import tpu as pltpu


_INV_SQRT2 = 0.7071067811865476
_SQRT_2_OVER_PI = 0.7978845608028654


def _gelu_exact(x):
    # nn.GELU() default is the exact (erf-based) GELU.
    return 0.5 * x * (1.0 + lax.erf(x * _INV_SQRT2))


def _gelu_tanh(x):
    # PyTorch nn.GELU(approximate="tanh"); transcendental runs on the EUP slot.
    return 0.5 * x * (1.0 + jnp.tanh(_SQRT_2_OVER_PI * (x + 0.044715 * x * x * x)))


# ----------------------------- kernel -----------------------------

def mlp_kernel(x_ref, w1_ref, b1_ref, w2_ref, b2_ref, o_ref, *, approx_gelu):
    # x_ref:  (TM, F*C_in)          (input dtype, e.g. f32)
    # w1_ref: (F*C_in, F*C_hid)     bf16 (block-diagonal when folded)
    # b1_ref: (1, F*C_hid)          f32
    # w2_ref: (F*C_hid, F*C_out)    bf16
    # b2_ref: (1, F*C_out)          f32
    # o_ref:  (TM, F*C_out)
    x = x_ref[...].astype(w1_ref.dtype)                       # bf16 MXU operand
    h = jnp.dot(x, w1_ref[...], preferred_element_type=jnp.float32)
    h = h + b1_ref[...]                                       # f32 elementwise path
    h = _gelu_tanh(h) if approx_gelu else _gelu_exact(h)
    y = jnp.dot(h.astype(w2_ref.dtype), w2_ref[...],          # bf16 MXU operand, f32 acc
                preferred_element_type=jnp.float32)
    y = y + b2_ref[...]
    o_ref[...] = y.astype(o_ref.dtype)


# --------------------------- helpers ---------------------------

def _cdiv(a, b):
    return -(-a // b)


def _round_up(x, m):
    return _cdiv(x, m) * m


def _lcm(a, b):
    return a * b // math.gcd(a, b)


def _choose_fold(c_in, c_hid, c_out, w_dsize):
    """Token-folding factor making x / out lane-dense (last dim % 128 == 0).

    Guarded so the block-diagonal (kron) weights never increase total MXU pass counts
    (conservative 128x128 MXU tile — holds on v5e too) and never blow up weight VMEM
    (weights grow by fold^2)."""
    f_in = 128 // math.gcd(128, c_in)
    f_out = 128 // math.gcd(128, c_out)
    fold = _lcm(f_in, f_out)
    if fold == 1:
        return 1
    if fold > 16:
        return 1

    k = 128

    def passes(a, b):
        return _cdiv(a, k) * _cdiv(b, k)

    ok_mxu = (passes(fold * c_in, fold * c_hid) <= fold * passes(c_in, c_hid)
              and passes(fold * c_hid, fold * c_out) <= fold * passes(c_hid, c_out))
    ok_mem = fold * fold * (c_in * c_hid + c_hid * c_out) * w_dsize <= 4 * 1024 * 1024
    return fold if (ok_mxu and ok_mem) else 1


def _vmem_budget_bytes():
    # Conservative default is v7x-safe (64 MiB physical); use 75% of reported capacity
    # when the trace-time hardware query is available (96 MiB on v5e/v6e).
    budget = 48 * 1024 * 1024
    try:
        info = pltpu.get_tpu_info()
        cap = int(getattr(info, "vmem_capacity_bytes"))
        budget = min(int(cap * 3 // 4), 96 * 1024 * 1024)
    except Exception:
        pass
    return budget


def _choose_tile(mf, fold, c_in, c_hid, c_out, x_dsize, out_dsize, w_dsize,
                 align, tile_m_max):
    budget = _vmem_budget_bytes()
    # Weights + biases are grid-invariant but counted double-buffered (conservative).
    w_bytes = 2 * fold * fold * (c_in * c_hid + c_hid * c_out) * w_dsize
    w_bytes += 2 * fold * (c_hid + c_out) * 4
    # Per folded-row bytes: x/out tiles double-buffered + f32 hidden + its bf16 copy.
    per_row = (2 * fold * c_in * x_dsize
               + 2 * fold * c_out * out_dsize
               + fold * c_hid * (4 + w_dsize))
    avail = max(budget - w_bytes, per_row * align)
    tile_vmem = max(align, (avail // per_row) // align * align)

    tile = min(tile_m_max, tile_vmem, _round_up(mf, align))
    # Keep ~4 grid steps whenever there is enough work: megacore sharding on v7x's two
    # TensorCores and DMA/compute overlap from the BlockSpec pipeline on 1-TC chips.
    if mf >= 2 * align:
        tile = min(tile, _round_up(_cdiv(mf, 4), align))
    tile = max(tile, align)
    return tile, budget


# ---------------------- parameter preparation ----------------------

class MlpParams(NamedTuple):
    w1: jax.Array   # (fold*C_in,  fold*C_hid)  block-diagonal, compute dtype (bf16)
    b1: jax.Array   # (1, fold*C_hid)           f32
    w2: jax.Array   # (fold*C_hid, fold*C_out)  block-diagonal, compute dtype (bf16)
    b2: jax.Array   # (1, fold*C_out)           f32
    fold: int
    c_in: int
    c_hid: int
    c_out: int


def prepare_mlp_params(w1, b1, w2, b2, *, compute_dtype=jnp.bfloat16):
    """One-time (parameter-load-time) weight folding + bf16 casting.

    w1: (C_in, C_hid), w2: (C_hid, C_out)  -- stored (in, out), i.e. PyTorch weight.T
    """
    c_in, c_hid = w1.shape
    c_hid2, c_out = w2.shape
    assert c_hid == c_hid2, "fc1/fc2 hidden dims must match"
    w_dsize = jnp.dtype(compute_dtype).itemsize
    fold = _choose_fold(c_in, c_hid, c_out, w_dsize)

    eye = jnp.eye(fold, dtype=compute_dtype)
    w1_f = jnp.kron(eye, w1.astype(compute_dtype))     # block-diagonal
    w2_f = jnp.kron(eye, w2.astype(compute_dtype))
    b1_f = jnp.tile(b1.astype(jnp.float32), fold).reshape(1, fold * c_hid)
    b2_f = jnp.tile(b2.astype(jnp.float32), fold).reshape(1, fold * c_out)
    return MlpParams(w1_f, b1_f, w2_f, b2_f, fold, c_in, c_hid, c_out)


# --------------------------- forward ---------------------------

@functools.partial(jax.jit, static_argnames=("fold", "tile_m_max", "approx_gelu"))
def _mlp_forward_folded(x, w1_f, b1_f, w2_f, b2_f, *, fold, tile_m_max, approx_gelu):
    B, N, c_in = x.shape
    fc_in, fc_hid = w1_f.shape
    fc_out = w2_f.shape[1]
    assert fc_in == fold * c_in
    c_hid = fc_hid // fold
    c_out = fc_out // fold
    M = B * N

    # Pad tokens only to a multiple of `fold` (<= fold-1 rows; skipped when divisible).
    mf = _cdiv(M, fold)
    m_pad = mf * fold
    x2d = x.reshape(M, c_in)
    if m_pad != M:
        x2d = jnp.pad(x2d, ((0, m_pad - M), (0, 0)))
    x_f = x2d.reshape(mf, fc_in)

    out_dtype = x.dtype
    align = 16 if x.dtype == jnp.bfloat16 else 8
    tile, vmem_limit = _choose_tile(
        mf, fold, c_in, c_hid, c_out,
        jnp.dtype(x.dtype).itemsize, jnp.dtype(out_dtype).itemsize,
        jnp.dtype(w1_f.dtype).itemsize, align, tile_m_max)

    # Non-divisible grid: the last block may be partial.  OOB rows read undefined data,
    # but rows are independent through the MLP and OOB output rows are masked on store.
    grid = (_cdiv(mf, tile),)

    kernel = functools.partial(mlp_kernel, approx_gelu=approx_gelu)
    out = pl.pallas_call(
        kernel,
        out_shape=jax.ShapeDtypeStruct((mf, fc_out), out_dtype),
        grid_spec=pltpu.PrefetchScalarGridSpec(
            num_scalar_prefetch=0,
            grid=grid,
            in_specs=[
                pl.BlockSpec((tile, fc_in), lambda i: (i, 0)),
                pl.BlockSpec((fc_in, fc_hid), lambda i: (0, 0)),   # VMEM-resident
                pl.BlockSpec((1, fc_hid), lambda i: (0, 0)),
                pl.BlockSpec((fc_hid, fc_out), lambda i: (0, 0)),  # VMEM-resident
                pl.BlockSpec((1, fc_out), lambda i: (0, 0)),
            ],
            out_specs=pl.BlockSpec((tile, fc_out), lambda i: (i, 0)),
        ),
        compiler_params=pltpu.CompilerParams(
            dimension_semantics=("parallel",),
            vmem_limit_bytes=vmem_limit,
        ),
    )(x_f, w1_f, b1_f, w2_f, b2_f)

    out = out.reshape(m_pad, c_out)
    if m_pad != M:
        out = out[:M]
    return out.reshape(B, N, c_out)


def mlp_forward(x, params: MlpParams, *, tile_m_max=1024, approx_gelu=False):
    """Fused MLP forward: fc1 -> GELU -> fc2 (dropout p=0 omitted).

    x: (B, N, C_in) -> (B, N, C_out).  `params` from prepare_mlp_params (weights are
    pre-folded / pre-cast once, not per forward call)."""
    return _mlp_forward_folded(
        x, params.w1, params.b1, params.w2, params.b2,
        fold=params.fold, tile_m_max=tile_m_max, approx_gelu=approx_gelu)


# --------------------------- reference ---------------------------

def reference_mlp(x, w1, b1, w2, b2, compute_dtype=jnp.float32):
    """Pure-JAX reference.  compute_dtype=bf16 emulates the kernel's MXU-operand
    precision (f32 accumulation) for tight comparison."""
    def q(a):
        return a.astype(compute_dtype).astype(jnp.float32)
    h = jnp.einsum("bnc,ch->bnh", q(x), q(w1),
                   preferred_element_type=jnp.float32) + b1.astype(jnp.float32)
    h = _gelu_exact(h)
    y = jnp.einsum("bnh,ho->bno", q(h), q(w2),
                   preferred_element_type=jnp.float32) + b2.astype(jnp.float32)
    return y


# ----------------------------- demo -----------------------------

if __name__ == "__main__":
    # Small, module-consistent shapes: B=2 windows, N=64 tokens per window,
    # in_features=32, hidden_features=64, out_features=32.
    B, N = 2, 64
    in_features, hidden_features, out_features = 32, 64, 32

    key = jax.random.PRNGKey(0)
    kx, k1, k2, k3, k4 = jax.random.split(key, 5)

    x = jax.random.normal(kx, (B, N, in_features), dtype=jnp.float32)

    # Synthetic params (shapes match nn.Linear(in, hidden) / (hidden, out)).
    # Stored transposed vs. PyTorch: (in, out) so the kernel does x @ W.
    w1 = jax.random.normal(k1, (in_features, hidden_features), dtype=jnp.float32) * 0.05
    b1 = jax.random.normal(k2, (hidden_features,), dtype=jnp.float32) * 0.01
    w2 = jax.random.normal(k3, (hidden_features, out_features), dtype=jnp.float32) * 0.05
    b2 = jax.random.normal(k4, (out_features,), dtype=jnp.float32) * 0.01

    # One-time weight folding / bf16 casting (hoisted out of the forward path).
    params = prepare_mlp_params(w1, b1, w2, b2)

    y = jax.block_until_ready(mlp_forward(x, params))
    assert y.shape == (B, N, out_features)

    # Tight check vs. a reference that emulates the same MXU operand precision.
    y_ref_bf16 = reference_mlp(x, w1, b1, w2, b2, compute_dtype=jnp.bfloat16)
    assert jnp.allclose(y, y_ref_bf16, atol=5e-3, rtol=5e-3), "mismatch vs bf16-emulating reference"

    # Loose sanity check vs. the pure-f32 module semantics.
    y_ref_f32 = reference_mlp(x, w1, b1, w2, b2, compute_dtype=jnp.float32)
    assert jnp.allclose(y, y_ref_f32, atol=1e-2, rtol=1e-2), "mismatch vs f32 reference"

    # Non-divisible-token path, M % fold == 0 (no padding, partial last grid block).
    x_even = jax.random.normal(kx, (2, 50, in_features), dtype=jnp.float32)
    y_even = jax.block_until_ready(mlp_forward(x_even, params))
    assert y_even.shape == (2, 50, out_features)
    assert jnp.allclose(y_even,
                        reference_mlp(x_even, w1, b1, w2, b2, compute_dtype=jnp.bfloat16),
                        atol=5e-3, rtol=5e-3), "mismatch (partial-block path)"

    # Non-divisible-token path, M % fold != 0 (exercises the <= fold-1 row padding).
    x_odd = jax.random.normal(kx, (2, 51, in_features), dtype=jnp.float32)
    y_odd = jax.block_until_ready(mlp_forward(x_odd, params))
    assert y_odd.shape == (2, 51, out_features)
    assert jnp.allclose(y_odd,
                        reference_mlp(x_odd, w1, b1, w2, b2, compute_dtype=jnp.bfloat16),
                        atol=5e-3, rtol=5e-3), "mismatch (fold-padding path)"

    print("KERNEL_OK")
</pallas_src>

<mosaic_0001>
module attributes {stable_mosaic.version = 11 : i64} {
  func.func @mlp_kernel(%arg0: i32, %arg1: memref<8x128xf32, #tpu.memory_space<vmem>>, %arg2: memref<128x256xbf16, #tpu.memory_space<vmem>>, %arg3: memref<1x256xf32, #tpu.memory_space<vmem>>, %arg4: memref<256x128xbf16, #tpu.memory_space<vmem>>, %arg5: memref<1x128xf32, #tpu.memory_space<vmem>>, %arg6: memref<8x128xf32, #tpu.memory_space<vmem>>) attributes {dimension_semantics = [#tpu.dimension_semantics<parallel>], iteration_bounds = array<i64: 4>, scalar_prefetch = 0 : i64, scratch_operands = 0 : i64, tpu.core_type = #tpu.core_type<tc>, window_params = [{transform_indices = @transform_0, window_bounds = array<i64: 8, 128>}, {pipeline_mode = #tpu.pipeline_mode<synchronous>, transform_indices = @transform_1, window_bounds = array<i64: 128, 256>}, {pipeline_mode = #tpu.pipeline_mode<synchronous>, transform_indices = @transform_2, window_bounds = array<i64: 1, 256>}, {pipeline_mode = #tpu.pipeline_mode<synchronous>, transform_indices = @transform_3, window_bounds = array<i64: 256, 128>}, {pipeline_mode = #tpu.pipeline_mode<synchronous>, transform_indices = @transform_4, window_bounds = array<i64: 1, 128>}, {transform_indices = @transform_5, window_bounds = array<i64: 8, 128>}]} {
    %c0 = arith.constant 0 : index
    %c0_0 = arith.constant 0 : index
    %0 = vector.load %arg1[%c0, %c0_0] : memref<8x128xf32, #tpu.memory_space<vmem>>, vector<8x128xf32>
    %1 = arith.truncf %0 : vector<8x128xf32> to vector<8x128xbf16>
    %c0_1 = arith.constant 0 : index
    %c0_2 = arith.constant 0 : index
    %2 = vector.load %arg2[%c0_1, %c0_2] : memref<128x256xbf16, #tpu.memory_space<vmem>>, vector<128x256xbf16>
    %cst = arith.constant dense<0.000000e+00> : vector<8x256xf32>
    %3 = tpu.matmul %1, %2, %cst {dimension_numbers = #tpu.dot_dimension_numbers<[1], [0], [0], [1], [0, 0, 1, 1], [], []>} : vector<8x128xbf16>, vector<128x256xbf16>, vector<8x256xf32> -> vector<8x256xf32>
    %c0_3 = arith.constant 0 : index
    %c0_4 = arith.constant 0 : index
    %4 = vector.load %arg3[%c0_3, %c0_4] : memref<1x256xf32, #tpu.memory_space<vmem>>, vector<1x256xf32>
    %5 = vector.broadcast %4 : vector<1x256xf32> to vector<8x256xf32>
    %6 = arith.addf %3, %5 : vector<8x256xf32>
    %cst_5 = arith.constant 5.000000e-01 : f32
    %7 = vector.broadcast %cst_5 : f32 to vector<8x256xf32>
    %8 = arith.mulf %7, %6 : vector<8x256xf32>
    %cst_6 = arith.constant 0.707106769 : f32
    %9 = vector.broadcast %cst_6 : f32 to vector<8x256xf32>
    %10 = arith.mulf %6, %9 : vector<8x256xf32>
    %11 = math.erf %10 : vector<8x256xf32>
    %cst_7 = arith.constant 1.000000e+00 : f32
    %12 = vector.broadcast %cst_7 : f32 to vector<8x256xf32>
    %13 = arith.addf %12, %11 : vector<8x256xf32>
    %14 = arith.mulf %8, %13 : vector<8x256xf32>
    %15 = arith.truncf %14 : vector<8x256xf32> to vector<8x256xbf16>
    %c0_8 = arith.constant 0 : index
    %c0_9 = arith.constant 0 : index
    %16 = vector.load %arg4[%c0_8, %c0_9] : memref<256x128xbf16, #tpu.memory_space<vmem>>, vector<256x128xbf16>
    %cst_10 = arith.constant dense<0.000000e+00> : vector<8x128xf32>
    %17 = tpu.matmul %15, %16, %cst_10 {dimension_numbers = #tpu.dot_dimension_numbers<[1], [0], [0], [1], [0, 0, 1, 1], [], []>} : vector<8x256xbf16>, vector<256x128xbf16>, vector<8x128xf32> -> vector<8x128xf32>
    %c0_11 = arith.constant 0 : index
    %c0_12 = arith.constant 0 : index
    %18 = vector.load %arg5[%c0_11, %c0_12] : memref<1x128xf32, #tpu.memory_space<vmem>>, vector<1x128xf32>
    %19 = vector.broadcast %18 : vector<1x128xf32> to vector<8x128xf32>
    %20 = arith.addf %17, %19 : vector<8x128xf32>
    %c0_13 = arith.constant 0 : index
    %c0_14 = arith.constant 0 : index
    %21 = vector.load %arg6[%c0_13, %c0_14] : memref<8x128xf32, #tpu.memory_space<vmem>>, vector<8x128xf32>
    tpu.vector_store %arg6[%c0_13, %c0_14], %20 {strides = array<i32>} : memref<8x128xf32, #tpu.memory_space<vmem>>, vector<8x128xf32>,
    return
  }
  func.func @transform_0(%arg0: i32) -> (i32, i32) {
    %c0_i32 = arith.constant 0 : i32
    %c0_i32_0 = arith.constant 0 : i32
    return %arg0, %c0_i32 : i32, i32
  }
  func.func @transform_1(%arg0: i32) -> (i32, i32) {
    %c0_i32 = arith.constant 0 : i32
    %c0_i32_0 = arith.constant 0 : i32
    %c0_i32_1 = arith.constant 0 : i32
    return %c0_i32, %c0_i32_0 : i32, i32
  }
  func.func @transform_2(%arg0: i32) -> (i32, i32) {
    %c0_i32 = arith.constant 0 : i32
    %c0_i32_0 = arith.constant 0 : i32
    %c0_i32_1 = arith.constant 0 : i32
    return %c0_i32, %c0_i32_0 : i32, i32
  }
  func.func @transform_3(%arg0: i32) -> (i32, i32) {
    %c0_i32 = arith.constant 0 : i32
    %c0_i32_0 = arith.constant 0 : i32
    %c0_i32_1 = arith.constant 0 : i32
    return %c0_i32, %c0_i32_0 : i32, i32
  }
  func.func @transform_4(%arg0: i32) -> (i32, i32) {
    %c0_i32 = arith.constant 0 : i32
    %c0_i32_0 = arith.constant 0 : i32
    %c0_i32_1 = arith.constant 0 : i32
    return %c0_i32, %c0_i32_0 : i32, i32
  }
  func.func @transform_5(%arg0: i32) -> (i32, i32) {
    %c0_i32 = arith.constant 0 : i32
    %c0_i32_0 = arith.constant 0 : i32
    return %arg0, %c0_i32 : i32, i32
  }
}

</mosaic_0001>

<llo_original>
// kernel: _mlp_forward_folded.1
$region0: #{_mlp_forward_folded.1}
  #allocation0 [shape = 'u32[]', space=smem, size = 0x4, offset = 0x4, fixed_abs, tag = 'smem constant byte address 0x4 - core index']
  #allocation1 [shape = 'u32[144,128]{1,0:T(1,128)}', space=vmem, size = 0x12000, scoped, tag = 'internal scratch']
  %s0 = inlined_call_operand.vmem [shape: f32[32,128], index: 0, kind: input, shape index: {}]
  %s1 = inlined_call_operand.vmem [shape: bf16[128,256], index: 1, kind: input, shape index: {}]
  %s2 = inlined_call_operand.vmem [shape: f32[1,256], index: 2, kind: input, shape index: {}]
  %s3 = inlined_call_operand.vmem [shape: bf16[256,128], index: 3, kind: input, shape index: {}]
  %s4 = inlined_call_operand.vmem [shape: f32[1,128], index: 4, kind: input, shape index: {}]
  %s5 = inlined_call_operand.vmem [shape: f32[32,128], index: 5, kind: output, shape index: {}]
  %s6 = sld [smem:[#allocation0]]
  $region53: #{_mlp_forward_folded.1} parent=0
    _
  %s8 = ssub.s32 1, %s6
  %s9 = scalar_select 0, %s8, %s6
  loop: start=0, step=1, limit=6
  $region2: #{_mlp_forward_folded.1} parent=0 // loop_pre_header
    _
  $region3: #{_mlp_forward_folded.1} parent=0 // loop_header
    %s11 = sphi 0, %s15
    %p12 = scmp.ge.s32.totalorder %s11, 6
    %s21 = sphi 0, %s23
    %s24 = sphi 0, %s21
    %s25 = sphi 0, %s24
    %s41 = sphi 0, %s25
    %s45 = sphi 0, %s45
    %s47 = sphi 0, %s45
    %s48 = sphi 0, %s47
    %s62 = sphi 0, %s48
    %s66 = sphi 0, %s66
    %s68 = sphi 0, %s66
    %s69 = sphi 0, %s68
    %s83 = sphi 0, %s69
    %s87 = sphi 0, %s87
    %s89 = sphi 0, %s87
    %s90 = sphi 0, %s89
    %s104 = sphi 0, %s90
    %s108 = sphi 0, %s108
    %s110 = sphi 0, %s108
    %s111 = sphi 0, %s110
    %s125 = sphi 0, %s111
    %s131 = sphi 0, %s133
    %s134 = sphi 0, %s131
    %s135 = sphi 0, %s134
    %s151 = sphi 0, %s135
  $region4: #{_mlp_forward_folded.1} parent=0 // loop_header_branch
    %14 = sbr.rel (%p12) target = $region8
  $region5: #{_mlp_forward_folded.1} parent=0 // loop_body
    %s16 = ssub.s32 %s11, 1
    %s17 = ssub.s32 %s11, 2
    %s18 = sadd.s32 %s11, 1
    %s19 = ssub.s32 %s11, %s18
    %p20 = scmp.eq.s32.totalorder %s19, 0
    %s22 = sadd.s32 %s21, 1
    %s23 = scalar_select %p20, %s21, %s22
    %p26 = pneg %p20
    %p27 = scmp.eq.s32.totalorder %s11, 3
    %p28 = por %p26, %p27
    %p29 = scmp.ne.s32.totalorder %s21, %s24
    %p30 = scmp.eq.s32.totalorder %s11, 0
    %p31 = por %p29, %p30
    %p32 = scmp.ne.s32.totalorder %s21, %s24
    %p33 = scmp.eq.s32.totalorder %s16, 3
    %p34 = por %p32, %p33
    %p35 = scmp.ne.s32.totalorder %s24, %s25
    %p36 = scmp.eq.s32.totalorder %s16, 0
    %p37 = por %p35, %p36
    %p38 = scmp.ne.s32.totalorder %s24, %s25
    %p39 = scmp.eq.s32.totalorder %s17, 3
    %p40 = por %p38, %p39
    %p42 = scmp.ne.s32.totalorder %s25, %s41
    %p43 = scmp.eq.s32.totalorder %s17, 0
    %p44 = por %p42, %p43
    %s46 = sadd.s32 %s45, 1
    %p49 = scmp.eq.s32.totalorder %s11, 3
    %p50 = scmp.ne.s32.totalorder %s45, %s47
    %p51 = scmp.eq.s32.totalorder %s11, 0
    %p52 = por %p50, %p51
    %p53 = scmp.ne.s32.totalorder %s45, %s47
    %p54 = scmp.eq.s32.totalorder %s16, 3
    %p55 = por %p53, %p54
    %p56 = scmp.ne.s32.totalorder %s47, %s48
    %p57 = scmp.eq.s32.totalorder %s16, 0
    %p58 = por %p56, %p57
    %p59 = scmp.ne.s32.totalorder %s47, %s48
    %p60 = scmp.eq.s32.totalorder %s17, 3
    %p61 = por %p59, %p60
    %p63 = scmp.ne.s32.totalorder %s48, %s62
    %p64 = scmp.eq.s32.totalorder %s17, 0
    %p65 = por %p63, %p64
    %s67 = sadd.s32 %s66, 1
    %p70 = scmp.eq.s32.totalorder %s11, 3
    %p71 = scmp.ne.s32.totalorder %s66, %s68
    %p72 = scmp.eq.s32.totalorder %s11, 0
    %p73 = por %p71, %p72
    %p74 = scmp.ne.s32.totalorder %s66, %s68
    %p75 = scmp.eq.s32.totalorder %s16, 3
    %p76 = por %p74, %p75
    %p77 = scmp.ne.s32.totalorder %s68, %s69
    %p78 = scmp.eq.s32.totalorder %s16, 0
    %p79 = por %p77, %p78
    %p80 = scmp.ne.s32.totalorder %s68, %s69
    %p81 = scmp.eq.s32.totalorder %s17, 3
    %p82 = por %p80, %p81
    %p84 = scmp.ne.s32.totalorder %s69, %s83
    %p85 = scmp.eq.s32.totalorder %s17, 0
    %p86 = por %p84, %p85
    %s88 = sadd.s32 %s87, 1
    %p91 = scmp.eq.s32.totalorder %s11, 3
    %p92 = scmp.ne.s32.totalorder %s87, %s89
    %p93 = scmp.eq.s32.totalorder %s11, 0
    %p94 = por %p92, %p93
    %p95 = scmp.ne.s32.totalorder %s87, %s89
    %p96 = scmp.eq.s32.totalorder %s16, 3
    %p97 = por %p95, %p96
    %p98 = scmp.ne.s32.totalorder %s89, %s90
    %p99 = scmp.eq.s32.totalorder %s16, 0
    %p100 = por %p98, %p99
    %p101 = scmp.ne.s32.totalorder %s89, %s90
    %p102 = scmp.eq.s32.totalorder %s17, 3
    %p103 = por %p101, %p102
    %p105 = scmp.ne.s32.totalorder %s90, %s104
    %p106 = scmp.eq.s32.totalorder %s17, 0
    %p107 = por %p105, %p106
    %s109 = sadd.s32 %s108, 1
    %p112 = scmp.eq.s32.totalorder %s11, 3
    %p113 = scmp.ne.s32.totalorder %s108, %s110
    %p114 = scmp.eq.s32.totalorder %s11, 0
    %p115 = por %p113, %p114
    %p116 = scmp.ne.s32.totalorder %s108, %s110
    %p117 = scmp.eq.s32.totalorder %s16, 3
    %p118 = por %p116, %p117
    %p119 = scmp.ne.s32.totalorder %s110, %s111
    %p120 = scmp.eq.s32.totalorder %s16, 0
    %p121 = por %p119, %p120
    %p122 = scmp.ne.s32.totalorder %s110, %s111
    %p123 = scmp.eq.s32.totalorder %s17, 3
    %p124 = por %p122, %p123
    %p126 = scmp.ne.s32.totalorder %s111, %s125
    %p127 = scmp.eq.s32.totalorder %s17, 0
    %p128 = por %p126, %p127
    %s129 = ssub.s32 %s11, %s18
    %p130 = scmp.eq.s32.totalorder %s129, 0
    %s132 = sadd.s32 %s131, 1
    %s133 = scalar_select %p130, %s131, %s132
    %p136 = pneg %p130
    %p137 = scmp.eq.s32.totalorder %s11, 3
    %p138 = por %p136, %p137
    %p139 = scmp.ne.s32.totalorder %s131, %s134
    %p140 = scmp.eq.s32.totalorder %s11, 0
    %p141 = por %p139, %p140
    %p142 = scmp.ne.s32.totalorder %s131, %s134
    %p143 = scmp.eq.s32.totalorder %s16, 3
    %p144 = por %p142, %p143
    %p145 = scmp.ne.s32.totalorder %s134, %s135
    %p146 = scmp.eq.s32.totalorder %s16, 0
    %p147 = por %p145, %p146
    %p148 = scmp.ne.s32.totalorder %s134, %s135
    %p149 = scmp.eq.s32.totalorder %s17, 3
    %p150 = por %p148, %p149
    %p152 = scmp.ne.s32.totalorder %s135, %s151
    %p153 = scmp.eq.s32.totalorder %s17, 0
    %p154 = por %p152, %p153
    %p155 = scmp.le.s32.totalorder 1, %s11
    %p156 = scmp.lt.s32.totalorder %s11, 5
    %p157 = pnand %p155, %p156
    %p158 = pneg %p157
    // Predicated region
    $region9: #{_mlp_forward_folded.1} parent=5 // pred_check
      _
    $region10: #{_mlp_forward_folded.1} parent=5 // pred_check_branch
      %160 = sbr.rel (%p157) target = $region12
    $region11: #{_mlp_forward_folded.1} parent=5 // pred_region
      %s161 = ssub.s32 %s11, 1
      // Predicated region
      $region13: #{_mlp_forward_folded.1} parent=11 // pred_check
        %p162 = pneg %p58
      $region14: #{_mlp_forward_folded.1} parent=11 // pred_check_branch
        %164 = sbr.rel (%p162) target = $region16
      $region15: #{_mlp_forward_folded.1} parent=11 // pred_region
        _
      $region16: #{_mlp_forward_folded.1} parent=11 // pred_fallthru
        _
      // Predicated region
      $region17: #{_mlp_forward_folded.1} parent=11 // pred_check
        %p165 = pneg %p79
      $region18: #{_mlp_forward_folded.1} parent=11 // pred_check_branch
        %167 = sbr.rel (%p165) target = $region20
      $region19: #{_mlp_forward_folded.1} parent=11 // pred_region
        _
      $region20: #{_mlp_forward_folded.1} parent=11 // pred_fallthru
        _
      // Predicated region
      $region21: #{_mlp_forward_folded.1} parent=11 // pred_check
        %p168 = pneg %p100
      $region22: #{_mlp_forward_folded.1} parent=11 // pred_check_branch
        %170 = sbr.rel (%p168) target = $region24
      $region23: #{_mlp_forward_folded.1} parent=11 // pred_region
        _
      $region24: #{_mlp_forward_folded.1} parent=11 // pred_fallthru
        _
      // Predicated region
      $region25: #{_mlp_forward_folded.1} parent=11 // pred_check
        %p171 = pneg %p121
      $region26: #{_mlp_forward_folded.1} parent=11 // pred_check_branch
        %173 = sbr.rel (%p171) target = $region28
      $region27: #{_mlp_forward_folded.1} parent=11 // pred_region
        _
      $region28: #{_mlp_forward_folded.1} parent=11 // pred_fallthru
        _
    $region12: #{_mlp_forward_folded.1} parent=5 // pred_fallthru
      _
    %p174 = scmp.lt.s32.totalorder %s11, 4
    // Predicated region
    $region29: #{_mlp_forward_folded.1} parent=5 // pred_check
      %p175 = pneg %p174
    $region30: #{_mlp_forward_folded.1} parent=5 // pred_check_branch
      %177 = sbr.rel (%p175) target = $region32
    $region31: #{_mlp_forward_folded.1} parent=5 // pred_region
      // Predicated region
      $region33: #{_mlp_forward_folded.1} parent=31 // pred_check
        %p178 = pneg %p31
      $region34: #{_mlp_forward_folded.1} parent=31 // pred_check_branch
        %180 = sbr.rel (%p178) target = $region36
      $region35: #{_mlp_forward_folded.1} parent=31 // pred_region
        %p181 = scmp.lt.s32.totalorder %s11, 3
        %s182 = scalar_select %p181, %s11, 3
        %s183 = smul.addr %s182, 8
        %s184 = scalar_lea.vmem %s0, %s183
      $region36: #{_mlp_forward_folded.1} parent=31 // pred_fallthru
        _
    $region32: #{_mlp_forward_folded.1} parent=5 // pred_fallthru
      _
    %p185 = scmp.le.s32.totalorder 1, %s11
    %p186 = scmp.lt.s32.totalorder %s11, 5
    %p187 = pnand %p185, %p186
    %p188 = pneg %p187
    // Predicated region
    $region37: #{_mlp_forward_folded.1} parent=5 // pred_check
      _
    $region38: #{_mlp_forward_folded.1} parent=5 // pred_check_branch
      %190 = sbr.rel (%p187) target = $region40
    $region39: #{_mlp_forward_folded.1} parent=5 // pred_region
      %s191 = ssub.s32 %s11, 1
      %p192 = scmp.lt.s32.totalorder %s16, 3
      %s193 = scalar_select %p192, %s16, 3
      %s194 = smul.addr %s193, 8
      %s195 = scalar_lea.vmem %s0, %s194
      %p196 = pneg %p37
      %p197 = pneg %p34
      %p198 = pneg %p58
      %p199 = pneg %p55
      %p200 = pneg %p79
      %p201 = pneg %p76
      %p202 = pneg %p100
      %p203 = pneg %p97
      %p204 = pneg %p121
      %p205 = pneg %p118
      %p206 = pneg %p147
      %p207 = pneg %p144
      %p208 = scmp.lt.s32.totalorder %s16, 3
      %s209 = scalar_select %p208, %s16, 3
      %s210 = smul.addr %s209, 8
      %s211 = scalar_lea.vmem %s5, %s210
      %p212 = scmp.lt.s32.totalorder %s16, 3
      %s213 = scalar_select %p212, %s16, 3
      %s214 = smul.addr %s213, 8
      %s215 = scalar_lea.vmem %s0, %s214
      %p216 = scmp.lt.s32.totalorder %s16, 3
      %s217 = scalar_select %p216, %s16, 3
      %s218 = smul.addr %s217, 8
      %s219 = scalar_lea.vmem %s5, %s218
      %v221 = vld [vmem:[%s215] sm:$0xff]
      %v222 = vpack.c.bf16 %v221, %v221
      %v223 = vld [vmem:[%s1] sm:$0xff]
      %v224 = vld [vmem:[%s1 + $0x8] sm:$0xff]
      %v225 = vld [vmem:[%s1 + $0x10] sm:$0xff]
      %v226 = vld [vmem:[%s1 + $0x18] sm:$0xff]
      %v227 = vld [vmem:[%s1 + $0x20] sm:$0xff]
      %v228 = vld [vmem:[%s1 + $0x28] sm:$0xff]
      %v229 = vld [vmem:[%s1 + $0x30] sm:$0xff]
      %v230 = vld [vmem:[%s1 + $0x38] sm:$0xff]
      %v231 = vld [vmem:[%s1 + $0x40] sm:$0xff]
      %v232 = vld [vmem:[%s1 + $0x48] sm:$0xff]
      %v233 = vld [vmem:[%s1 + $0x50] sm:$0xff]
      %v234 = vld [vmem:[%s1 + $0x58] sm:$0xff]
      %v235 = vld [vmem:[%s1 + $0x60] sm:$0xff]
      %v236 = vld [vmem:[%s1 + $0x68] sm:$0xff]
      %v237 = vld [vmem:[%s1 + $0x70] sm:$0xff]
      %v238 = vld [vmem:[%s1 + $0x78] sm:$0xff]
      %v239 = vld [vmem:[%s2] sm:$0x3]
      %v241 = vlaneseq
      %v242 = vshrl.u32 %v241, 7
      %v243 = vsub.s32 0, %v242
      %v244 = vrot.slane %v239, %v243
      %v245 = vlaneseq
      %v246 = vshrl.u32 %v245, 7
      %v247 = vsub.s32 1, %v246
      %v248 = vrot.slane %v239, %v247
      %v267 = vunpack.c.l.b16 %v223
      %v268 = vunpack.c.h.b16 %v223
      %v269 = vunpack.c.l.b16 %v224
      %v270 = vunpack.c.h.b16 %v224
      %v271 = vunpack.c.l.b16 %v225
      %v272 = vunpack.c.h.b16 %v225
      %v273 = vunpack.c.l.b16 %v226
      %v274 = vunpack.c.h.b16 %v226
      %v275 = vunpack.c.l.b16 %v227
      %v276 = vunpack.c.h.b16 %v227
      %v277 = vunpack.c.l.b16 %v228
      %v278 = vunpack.c.h.b16 %v228
      %v279 = vunpack.c.l.b16 %v229
      %v280 = vunpack.c.h.b16 %v229
      %v281 = vunpack.c.l.b16 %v230
      %v282 = vunpack.c.h.b16 %v230
      %v283 = vunpack.c.l.b16 %v231
      %v284 = vunpack.c.h.b16 %v231
      %v285 = vunpack.c.l.b16 %v232
      %v286 = vunpack.c.h.b16 %v232
      %v287 = vunpack.c.l.b16 %v233
      %v288 = vunpack.c.h.b16 %v233
      %v289 = vunpack.c.l.b16 %v234
      %v290 = vunpack.c.h.b16 %v234
      %v291 = vunpack.c.l.b16 %v235
      %v292 = vunpack.c.h.b16 %v235
      %v293 = vunpack.c.l.b16 %v236
      %v294 = vunpack.c.h.b16 %v236
      %v295 = vunpack.c.l.b16 %v237
      %v296 = vunpack.c.h.b16 %v237
      %v297 = vunpack.c.l.b16 %v238
      %v298 = vunpack.c.h.b16 %v238
      %v299 = vpack.c.b16 %v269, %v267
      %v300 = vpack.c.b16 %v270, %v268
      %v301 = vpack.c.b16 %v273, %v271
      %v302 = vpack.c.b16 %v274, %v272
      %v303 = vpack.c.b16 %v277, %v275
      %v304 = vpack.c.b16 %v278, %v276
      %v305 = vpack.c.b16 %v281, %v279
      %v306 = vpack.c.b16 %v282, %v280
      %v307 = vpack.c.b16 %v285, %v283
      %v308 = vpack.c.b16 %v286, %v284
      %v309 = vpack.c.b16 %v289, %v287
      %v310 = vpack.c.b16 %v290, %v288
      %v311 = vpack.c.b16 %v293, %v291
      %v312 = vpack.c.b16 %v294, %v292
      %v313 = vpack.c.b16 %v297, %v295
      %v314 = vpack.c.b16 %v298, %v296
      %331 = vmatprep.subr.bf16.mxu0 %v300
      %332 = vmatpush1.bf16.msra.mxu0 %v299
      %333 = vmatprep.subr.bf16.mxu0 %v302
      %334 = vmatpush1.bf16.msra.mxu0 %v301
      %335 = vmatprep.subr.bf16.mxu0 %v304
      %336 = vmatpush1.bf16.msra.mxu0 %v303
      %337 = vmatprep.subr.bf16.mxu0 %v306
      %338 = vmatpush1.bf16.msra.mxu0 %v305
      %339 = vmatprep.subr.bf16.mxu0 %v308
      %340 = vmatpush1.bf16.msra.mxu0 %v307
      %341 = vmatprep.subr.bf16.mxu0 %v310
      %342 = vmatpush1.bf16.msra.mxu0 %v309
      %343 = vmatprep.subr.bf16.mxu0 %v312
      %344 = vmatpush1.bf16.msra.mxu0 %v311
      %345 = vmatprep.subr.bf16.mxu0 %v314
      %346 = vmatpush1.bf16.msra.mxu0 %v313
      %347 = vmatprep.subr.bf16.mxu0 0
      %348 = vmatpush1.bf16.msra.mxu0 0
      %349 = vmatprep.subr.bf16.mxu0 0
      %350 = vmatpush1.bf16.msra.mxu0 0
      %351 = vmatprep.subr.bf16.mxu0 0
      %352 = vmatpush1.bf16.msra.mxu0 0
      %353 = vmatprep.subr.bf16.mxu0 0
      %354 = vmatpush1.bf16.msra.mxu0 0
      %355 = vmatprep.subr.bf16.mxu0 0
      %356 = vmatpush1.bf16.msra.mxu0 0
      %357 = vmatprep.subr.bf16.mxu0 0
      %358 = vmatpush1.bf16.msra.mxu0 0
      %359 = vmatprep.subr.bf16.mxu0 0
      %360 = vmatpush1.bf16.msra.mxu0 0
      %361 = vmatprep.subr.bf16.mxu0 0
      %362 = vmatpush1.bf16.msra.mxu0 0
      %363 = vmatprep.mubr.bf16.mxu0 0
      %364 = vmatmul.mubr.bf16.gmra.mrb[0].mxu0 %v222
      %v365 = vpop.f32.mrb[0].mxu0
      %v366 = vadd.f32 %v244, %v365
      %v367 = vpop.f32.mrb[0].mxu0
      %v368 = vadd.f32 %v248, %v367
      %v369 = vpop.f32.mrb[0].mxu0
      %v370 = vpop.f32.mrb[0].mxu0
      %371 = vdwg.mxu0
      %v372 = vmul.f32 %v366, 0.5
      %v373 = vmul.f32 %v368, 0.5
      %v374 = vmul.f32 %v366, 0.70710677
      %v375 = vmul.f32 %v368, 0.70710677
      %v376 = verf.f32.pop %v374
      %v377 = verf.f32.pop %v375
      %v378 = vadd.f32 %v376, 1.0
      %v379 = vadd.f32 %v377, 1.0
      %v380 = vmul.f32 %v372, %v378
      %v381 = vmul.f32 %v373, %v379
      %v382 = vpack.c.bf16 %v380, %v380
      %v383 = vpack.c.bf16 %v381, %v381
      %v384 = vld [vmem:[%s3] sm:$0xf]
      %v385 = vld [vmem:[%s3 + $0x4] sm:$0xf]
      %v386 = vld [vmem:[%s3 + $0x8] sm:$0xf]
      %v387 = vld [vmem:[%s3 + $0xc] sm:$0xf]
      %v388 = vld [vmem:[%s3 + $0x10] sm:$0xf]
      %v389 = vld [vmem:[%s3 + $0x14] sm:$0xf]
      %v390 = vld [vmem:[%s3 + $0x18] sm:$0xf]
      %v391 = vld [vmem:[%s3 + $0x1c] sm:$0xf]
      %v392 = vld [vmem:[%s3 + $0x20] sm:$0xf]
      %v393 = vld [vmem:[%s3 + $0x24] sm:$0xf]
      %v394 = vld [vmem:[%s3 + $0x28] sm:$0xf]
      %v395 = vld [vmem:[%s3 + $0x2c] sm:$0xf]
      %v396 = vld [vmem:[%s3 + $0x30] sm:$0xf]
      %v397 = vld [vmem:[%s3 + $0x34] sm:$0xf]
      %v398 = vld [vmem:[%s3 + $0x38] sm:$0xf]
      %v399 = vld [vmem:[%s3 + $0x3c] sm:$0xf]
      %v400 = vld [vmem:[%s3 + $0x40] sm:$0xf]
      %v401 = vld [vmem:[%s3 + $0x44] sm:$0xf]
      %v402 = vld [vmem:[%s3 + $0x48] sm:$0xf]
      %v403 = vld [vmem:[%s3 + $0x4c] sm:$0xf]
      %v404 = vld [vmem:[%s3 + $0x50] sm:$0xf]
      %v405 = vld [vmem:[%s3 + $0x54] sm:$0xf]
      %v406 = vld [vmem:[%s3 + $0x58] sm:$0xf]
      %v407 = vld [vmem:[%s3 + $0x5c] sm:$0xf]
      %v408 = vld [vmem:[%s3 + $0x60] sm:$0xf]
      %v409 = vld [vmem:[%s3 + $0x64] sm:$0xf]
      %v410 = vld [vmem:[%s3 + $0x68] sm:$0xf]
      %v411 = vld [vmem:[%s3 + $0x6c] sm:$0xf]
      %v412 = vld [vmem:[%s3 + $0x70] sm:$0xf]
      %v413 = vld [vmem:[%s3 + $0x74] sm:$0xf]
      %v414 = vld [vmem:[%s3 + $0x78] sm:$0xf]
      %v415 = vld [vmem:[%s3 + $0x7c] sm:$0xf]
      %v416 = vld [vmem:[%s4] sm:$0x1]
      %v418 = vlaneseq
      %v419 = vshrl.u32 %v418, 7
      %v420 = vsub.s32 0, %v419
      %v421 = vrot.slane %v416, %v420
      %v455 = vunpack.c.l.b16 %v384
      %v456 = vunpack.c.l.b16 %v385
      %v457 = vunpack.c.l.b16 %v386
      %v458 = vunpack.c.l.b16 %v387
      %v459 = vunpack.c.l.b16 %v388
      %v460 = vunpack.c.l.b16 %v389
      %v461 = vunpack.c.l.b16 %v390
      %v462 = vunpack.c.l.b16 %v391
      %v463 = vunpack.c.l.b16 %v392
      %v464 = vunpack.c.l.b16 %v393
      %v465 = vunpack.c.l.b16 %v394
      %v466 = vunpack.c.l.b16 %v395
      %v467 = vunpack.c.l.b16 %v396
      %v468 = vunpack.c.l.b16 %v397
      %v469 = vunpack.c.l.b16 %v398
      %v470 = vunpack.c.l.b16 %v399
      %v471 = vunpack.c.l.b16 %v400
      %v472 = vunpack.c.l.b16 %v401
      %v473 = vunpack.c.l.b16 %v402
      %v474 = vunpack.c.l.b16 %v403
      %v475 = vunpack.c.l.b16 %v404
      %v476 = vunpack.c.l.b16 %v405
      %v477 = vunpack.c.l.b16 %v406
      %v478 = vunpack.c.l.b16 %v407
      %v479 = vunpack.c.l.b16 %v408
      %v480 = vunpack.c.l.b16 %v409
      %v481 = vunpack.c.l.b16 %v410
      %v482 = vunpack.c.l.b16 %v411
      %v483 = vunpack.c.l.b16 %v412
      %v484 = vunpack.c.l.b16 %v413
      %v485 = vunpack.c.l.b16 %v414
      %v486 = vunpack.c.l.b16 %v415
      %v487 = vpack.c.b16 %v456, %v455
      %v488 = vpack.c.b16 %v458, %v457
      %v489 = vpack.c.b16 %v460, %v459
      %v490 = vpack.c.b16 %v462, %v461
      %v491 = vpack.c.b16 %v464, %v463
      %v492 = vpack.c.b16 %v466, %v465
      %v493 = vpack.c.b16 %v468, %v467
      %v494 = vpack.c.b16 %v470, %v469
      %v495 = vpack.c.b16 %v472, %v471
      %v496 = vpack.c.b16 %v474, %v473
      %v497 = vpack.c.b16 %v476, %v475
      %v498 = vpack.c.b16 %v478, %v477
      %v499 = vpack.c.b16 %v480, %v479
      %v500 = vpack.c.b16 %v482, %v481
      %v501 = vpack.c.b16 %v484, %v483
      %v502 = vpack.c.b16 %v486, %v485
      %519 = vmatprep.subr.bf16.mxu0 0
      %520 = vmatpush1.bf16.msra.mxu0 %v487
      %521 = vmatprep.subr.bf16.mxu0 0
      %522 = vmatpush1.bf16.msra.mxu0 %v488
      %523 = vmatprep.subr.bf16.mxu0 0
      %524 = vmatpush1.bf16.msra.mxu0 %v489
      %525 = vmatprep.subr.bf16.mxu0 0
      %526 = vmatpush1.bf16.msra.mxu0 %v490
      %527 = vmatprep.subr.bf16.mxu0 0
      %528 = vmatpush1.bf16.msra.mxu0 %v491
      %529 = vmatprep.subr.bf16.mxu0 0
      %530 = vmatpush1.bf16.msra.mxu0 %v492
      %531 = vmatprep.subr.bf16.mxu0 0
      %532 = vmatpush1.bf16.msra.mxu0 %v493
      %533 = vmatprep.subr.bf16.mxu0 0
      %534 = vmatpush1.bf16.msra.mxu0 %v494
      %535 = vmatprep.subr.bf16.mxu0 0
      %536 = vmatpush1.bf16.msra.mxu0 %v495
      %537 = vmatprep.subr.bf16.mxu0 0
      %538 = vmatpush1.bf16.msra.mxu0 %v496
      %539 = vmatprep.subr.bf16.mxu0 0
      %540 = vmatpush1.bf16.msra.mxu0 %v497
      %541 = vmatprep.subr.bf16.mxu0 0
      %542 = vmatpush1.bf16.msra.mxu0 %v498
      %543 = vmatprep.subr.bf16.mxu0 0
      %544 = vmatpush1.bf16.msra.mxu0 %v499
      %545 = vmatprep.subr.bf16.mxu0 0
      %546 = vmatpush1.bf16.msra.mxu0 %v500
      %547 = vmatprep.subr.bf16.mxu0 0
      %548 = vmatpush1.bf16.msra.mxu0 %v501
      %549 = vmatprep.subr.bf16.mxu0 0
      %550 = vmatpush1.bf16.msra.mxu0 %v502
      %551 = vmatprep.mubr.bf16.mxu0 %v383
      %552 = vmatmul.mubr.bf16.gmra.mrb[0].mxu0 %v382
      %v553 = vpop.f32.mrb[0].mxu0
      %v554 = vadd.f32 %v421, %v553
      %v555 = vpop.f32.mrb[0].mxu0
      %v556 = vpop.f32.mrb[0].mxu0
      %v557 = vpop.f32.mrb[0].mxu0
      %558 = vdwg.mxu0
      %559 = vst [vmem:[%s219] sm:$0xff] %v554
      %p560 = scmp.lt.s32.totalorder %s16, 3
      %s561 = scalar_select %p560, %s16, 3
      %s562 = smul.addr %s561, 8
      %s563 = scalar_lea.vmem %s5, %s562
      // Predicated region
      $region41: #{_mlp_forward_folded.1} parent=39 // pred_check
        %p564 = pneg %p144
      $region42: #{_mlp_forward_folded.1} parent=39 // pred_check_branch
        %566 = sbr.rel (%p564) target = $region44
      $region43: #{_mlp_forward_folded.1} parent=39 // pred_region
        _
      $region44: #{_mlp_forward_folded.1} parent=39 // pred_fallthru
        _
    $region40: #{_mlp_forward_folded.1} parent=5 // pred_fallthru
      _
    %p567 = scmp.le.s32.totalorder 2, %s11
    // Predicated region
    $region45: #{_mlp_forward_folded.1} parent=5 // pred_check
      %p568 = pneg %p567
    $region46: #{_mlp_forward_folded.1} parent=5 // pred_check_branch
      %570 = sbr.rel (%p568) target = $region48
    $region47: #{_mlp_forward_folded.1} parent=5 // pred_region
      %s571 = ssub.s32 %s11, 2
      // Predicated region
      $region49: #{_mlp_forward_folded.1} parent=47 // pred_check
        %p572 = pneg %p150
      $region50: #{_mlp_forward_folded.1} parent=47 // pred_check_branch
        %574 = sbr.rel (%p572) target = $region52
      $region51: #{_mlp_forward_folded.1} parent=47 // pred_region
        %p575 = scmp.lt.s32.totalorder %s17, 3
        %s576 = scalar_select %p575, %s17, 3
        %s577 = smul.addr %s576, 8
        %s578 = scalar_lea.vmem %s5, %s577
      $region52: #{_mlp_forward_folded.1} parent=47 // pred_fallthru
        _
    $region48: #{_mlp_forward_folded.1} parent=5 // pred_fallthru
      _
  $region6: #{_mlp_forward_folded.1} parent=0 // loop_footer
    %s15 = sadd.s32 1, %s11
  $region7: #{_mlp_forward_folded.1} parent=0 // loop_footer_branch
    %10 = sbr.rel target = $region3
  $region8: #{_mlp_forward_folded.1} parent=0 // loop_exit
    _

</llo_original>
